<compile_context>
chip_gen: v6e
topology: v6e:2x2x1
jax: 0.10.0
libtpu: 0.0.40
codegen_flags: <defaults>
</compile_context>

<pallas_src>
import jax
import jax.numpy as jnp
from jax.experimental import pallas as pl
from jax.experimental.pallas import tpu as pltpu

LANES = 128          # vreg lane width
MAX_ROW_TILE = 512   # sublane rows per grid step -> 512 * 128 = 65536 idx/step


def _gather_sigmoid_kernel(s_ref, idx_ref, out_ref):
    # s_ref:   (P,) f32 in SMEM  -- precomputed sigmoid(table @ w + b)
    # idx_ref: (row_tile, 128) int32 -- position indices (lane-dense tile)
    # out_ref: (row_tile, 128) f32   -- gathered probabilities
    idx = idx_ref[...]
    acc = jnp.zeros(idx.shape, dtype=jnp.float32)
    p = s_ref.shape[0]
    for pv in range(p):                      # static unroll over tiny P
        acc = jnp.where(idx == pv, s_ref[pv], acc)   # whole-tile VPU select
    out_ref[...] = acc.astype(out_ref.dtype)          # one unmasked full store


@jax.jit
def position_model_forward(pos_indices, emb_table, lin_w, lin_b):
    """pos_indices: int array of any shape; returns pos_indices.shape + (1,)."""
    orig_shape = pos_indices.shape
    idx_flat = pos_indices.reshape(-1).astype(jnp.int32)
    n = idx_flat.shape[0]
    p, d = emb_table.shape

    # Hoisted projection: s[p] = sigmoid(table[p] . w + b), tiny (P,) vector.
    table_f32 = emb_table.astype(jnp.float32)
    w_f32 = lin_w.reshape(d).astype(jnp.float32)
    b_f32 = lin_b.astype(jnp.float32)
    s = jax.nn.sigmoid(table_f32 @ w_f32 + b_f32)     # (P,) -> SMEM

    # Lane-dense layout: rows of 128 lanes; row count a multiple of row_tile.
    nr = pl.cdiv(n, LANES)
    row_tile = min(MAX_ROW_TILE, pl.cdiv(nr, 8) * 8)  # multiple of 8 sublanes
    nr_pad = pl.cdiv(nr, row_tile) * row_tile
    total = nr_pad * LANES
    if total != n:                                    # skip pad when aligned
        idx_flat = jnp.pad(idx_flat, (0, total - n))
    idx2 = idx_flat.reshape(nr_pad, LANES)

    out = pl.pallas_call(
        _gather_sigmoid_kernel,
        out_shape=jax.ShapeDtypeStruct((nr_pad, LANES), jnp.float32),
        grid=(nr_pad // row_tile,),
        in_specs=[
            pl.BlockSpec(memory_space=pltpu.MemorySpace.SMEM),     # s table
            pl.BlockSpec((row_tile, LANES), lambda i: (i, 0)),     # idx tile
        ],
        out_specs=pl.BlockSpec((row_tile, LANES), lambda i: (i, 0)),
        compiler_params=pltpu.CompilerParams(
            dimension_semantics=("parallel",),
            vmem_limit_bytes=32 * 1024 * 1024),
    )(s, idx2)

    return out.reshape(-1)[:n].reshape(orig_shape + (1,))


def _reference(pos_indices, emb_table, lin_w, lin_b):
    emb = emb_table[pos_indices]                               # (..., D)
    logit = emb @ lin_w.reshape(-1, 1) + lin_b                 # (..., 1)
    return jax.nn.sigmoid(logit)


if __name__ == "__main__":
    # Small shapes consistent with the module.
    input_size = 32          # embedding / linear input dim
    max_num_position = 16    # vocabulary of positions
    batch, seq = 2, 8        # pos_indices shape (batch, seq)

    key = jax.random.PRNGKey(0)
    k_emb, k_w, k_b, k_idx = jax.random.split(key, 4)

    emb_table = jax.random.normal(k_emb, (max_num_position, input_size),
                                  dtype=jnp.float32)
    lin_w = jax.random.normal(k_w, (1, input_size), dtype=jnp.float32) * 0.1
    lin_b = jax.random.normal(k_b, (1,), dtype=jnp.float32) * 0.1

    pos_indices = jax.random.randint(k_idx, (batch, seq), 0, max_num_position,
                                     dtype=jnp.int32)

    out = position_model_forward(pos_indices, emb_table, lin_w, lin_b)
    out = jax.block_until_ready(out)

    ref = _reference(pos_indices, emb_table, lin_w, lin_b)
    assert out.shape == (batch, seq, 1), out.shape
    assert jnp.allclose(out, ref, atol=1e-5, rtol=1e-5), (out, ref)

    print("KERNEL_OK")
</pallas_src>

<mosaic_0001>
module attributes {stable_mosaic.version = 11 : i64} {
  func.func @_gather_sigmoid_kernel(%arg0: i32, %arg1: memref<16xf32, #tpu.memory_space<smem>>, %arg2: memref<8x128xi32, #tpu.memory_space<vmem>>, %arg3: memref<8x128xf32, #tpu.memory_space<vmem>>) attributes {dimension_semantics = [#tpu.dimension_semantics<parallel>], iteration_bounds = array<i64: 1>, scalar_prefetch = 0 : i64, scratch_operands = 0 : i64, tpu.core_type = #tpu.core_type<tc>, window_params = [{transform_indices = @transform_0, window_bounds = array<i64: 16>}, {transform_indices = @transform_1, window_bounds = array<i64: 8, 128>}, {transform_indices = @transform_2, window_bounds = array<i64: 8, 128>}]} {
    %c0 = arith.constant 0 : index
    %c0_0 = arith.constant 0 : index
    %0 = vector.load %arg2[%c0, %c0_0] : memref<8x128xi32, #tpu.memory_space<vmem>>, vector<8x128xi32>
    %cst = arith.constant 0.000000e+00 : f32
    %1 = vector.broadcast %cst : f32 to vector<8x128xf32>
    %c0_i32 = arith.constant 0 : i32
    %2 = vector.broadcast %c0_i32 : i32 to vector<8x128xi32>
    %3 = arith.cmpi eq, %0, %2 : vector<8x128xi32>
    %c0_1 = arith.constant 0 : index
    %4 = memref.load %arg1[%c0_1] : memref<16xf32, #tpu.memory_space<smem>>
    %5 = vector.broadcast %4 : f32 to vector<8x128xf32>
    %6 = arith.select %3, %5, %1 : vector<8x128xi1>, vector<8x128xf32>
    %c1_i32 = arith.constant 1 : i32
    %7 = vector.broadcast %c1_i32 : i32 to vector<8x128xi32>
    %8 = arith.cmpi eq, %0, %7 : vector<8x128xi32>
    %c1 = arith.constant 1 : index
    %9 = memref.load %arg1[%c1] : memref<16xf32, #tpu.memory_space<smem>>
    %10 = vector.broadcast %9 : f32 to vector<8x128xf32>
    %11 = arith.select %8, %10, %6 : vector<8x128xi1>, vector<8x128xf32>
    %c2_i32 = arith.constant 2 : i32
    %12 = vector.broadcast %c2_i32 : i32 to vector<8x128xi32>
    %13 = arith.cmpi eq, %0, %12 : vector<8x128xi32>
    %c2 = arith.constant 2 : index
    %14 = memref.load %arg1[%c2] : memref<16xf32, #tpu.memory_space<smem>>
    %15 = vector.broadcast %14 : f32 to vector<8x128xf32>
    %16 = arith.select %13, %15, %11 : vector<8x128xi1>, vector<8x128xf32>
    %c3_i32 = arith.constant 3 : i32
    %17 = vector.broadcast %c3_i32 : i32 to vector<8x128xi32>
    %18 = arith.cmpi eq, %0, %17 : vector<8x128xi32>
    %c3 = arith.constant 3 : index
    %19 = memref.load %arg1[%c3] : memref<16xf32, #tpu.memory_space<smem>>
    %20 = vector.broadcast %19 : f32 to vector<8x128xf32>
    %21 = arith.select %18, %20, %16 : vector<8x128xi1>, vector<8x128xf32>
    %c4_i32 = arith.constant 4 : i32
    %22 = vector.broadcast %c4_i32 : i32 to vector<8x128xi32>
    %23 = arith.cmpi eq, %0, %22 : vector<8x128xi32>
    %c4 = arith.constant 4 : index
    %24 = memref.load %arg1[%c4] : memref<16xf32, #tpu.memory_space<smem>>
    %25 = vector.broadcast %24 : f32 to vector<8x128xf32>
    %26 = arith.select %23, %25, %21 : vector<8x128xi1>, vector<8x128xf32>
    %c5_i32 = arith.constant 5 : i32
    %27 = vector.broadcast %c5_i32 : i32 to vector<8x128xi32>
    %28 = arith.cmpi eq, %0, %27 : vector<8x128xi32>
    %c5 = arith.constant 5 : index
    %29 = memref.load %arg1[%c5] : memref<16xf32, #tpu.memory_space<smem>>
    %30 = vector.broadcast %29 : f32 to vector<8x128xf32>
    %31 = arith.select %28, %30, %26 : vector<8x128xi1>, vector<8x128xf32>
    %c6_i32 = arith.constant 6 : i32
    %32 = vector.broadcast %c6_i32 : i32 to vector<8x128xi32>
    %33 = arith.cmpi eq, %0, %32 : vector<8x128xi32>
    %c6 = arith.constant 6 : index
    %34 = memref.load %arg1[%c6] : memref<16xf32, #tpu.memory_space<smem>>
    %35 = vector.broadcast %34 : f32 to vector<8x128xf32>
    %36 = arith.select %33, %35, %31 : vector<8x128xi1>, vector<8x128xf32>
    %c7_i32 = arith.constant 7 : i32
    %37 = vector.broadcast %c7_i32 : i32 to vector<8x128xi32>
    %38 = arith.cmpi eq, %0, %37 : vector<8x128xi32>
    %c7 = arith.constant 7 : index
    %39 = memref.load %arg1[%c7] : memref<16xf32, #tpu.memory_space<smem>>
    %40 = vector.broadcast %39 : f32 to vector<8x128xf32>
    %41 = arith.select %38, %40, %36 : vector<8x128xi1>, vector<8x128xf32>
    %c8_i32 = arith.constant 8 : i32
    %42 = vector.broadcast %c8_i32 : i32 to vector<8x128xi32>
    %43 = arith.cmpi eq, %0, %42 : vector<8x128xi32>
    %c8 = arith.constant 8 : index
    %44 = memref.load %arg1[%c8] : memref<16xf32, #tpu.memory_space<smem>>
    %45 = vector.broadcast %44 : f32 to vector<8x128xf32>
    %46 = arith.select %43, %45, %41 : vector<8x128xi1>, vector<8x128xf32>
    %c9_i32 = arith.constant 9 : i32
    %47 = vector.broadcast %c9_i32 : i32 to vector<8x128xi32>
    %48 = arith.cmpi eq, %0, %47 : vector<8x128xi32>
    %c9 = arith.constant 9 : index
    %49 = memref.load %arg1[%c9] : memref<16xf32, #tpu.memory_space<smem>>
    %50 = vector.broadcast %49 : f32 to vector<8x128xf32>
    %51 = arith.select %48, %50, %46 : vector<8x128xi1>, vector<8x128xf32>
    %c10_i32 = arith.constant 10 : i32
    %52 = vector.broadcast %c10_i32 : i32 to vector<8x128xi32>
    %53 = arith.cmpi eq, %0, %52 : vector<8x128xi32>
    %c10 = arith.constant 10 : index
    %54 = memref.load %arg1[%c10] : memref<16xf32, #tpu.memory_space<smem>>
    %55 = vector.broadcast %54 : f32 to vector<8x128xf32>
    %56 = arith.select %53, %55, %51 : vector<8x128xi1>, vector<8x128xf32>
    %c11_i32 = arith.constant 11 : i32
    %57 = vector.broadcast %c11_i32 : i32 to vector<8x128xi32>
    %58 = arith.cmpi eq, %0, %57 : vector<8x128xi32>
    %c11 = arith.constant 11 : index
    %59 = memref.load %arg1[%c11] : memref<16xf32, #tpu.memory_space<smem>>
    %60 = vector.broadcast %59 : f32 to vector<8x128xf32>
    %61 = arith.select %58, %60, %56 : vector<8x128xi1>, vector<8x128xf32>
    %c12_i32 = arith.constant 12 : i32
    %62 = vector.broadcast %c12_i32 : i32 to vector<8x128xi32>
    %63 = arith.cmpi eq, %0, %62 : vector<8x128xi32>
    %c12 = arith.constant 12 : index
    %64 = memref.load %arg1[%c12] : memref<16xf32, #tpu.memory_space<smem>>
    %65 = vector.broadcast %64 : f32 to vector<8x128xf32>
    %66 = arith.select %63, %65, %61 : vector<8x128xi1>, vector<8x128xf32>
    %c13_i32 = arith.constant 13 : i32
    %67 = vector.broadcast %c13_i32 : i32 to vector<8x128xi32>
    %68 = arith.cmpi eq, %0, %67 : vector<8x128xi32>
    %c13 = arith.constant 13 : index
    %69 = memref.load %arg1[%c13] : memref<16xf32, #tpu.memory_space<smem>>
    %70 = vector.broadcast %69 : f32 to vector<8x128xf32>
    %71 = arith.select %68, %70, %66 : vector<8x128xi1>, vector<8x128xf32>
    %c14_i32 = arith.constant 14 : i32
    %72 = vector.broadcast %c14_i32 : i32 to vector<8x128xi32>
    %73 = arith.cmpi eq, %0, %72 : vector<8x128xi32>
    %c14 = arith.constant 14 : index
    %74 = memref.load %arg1[%c14] : memref<16xf32, #tpu.memory_space<smem>>
    %75 = vector.broadcast %74 : f32 to vector<8x128xf32>
    %76 = arith.select %73, %75, %71 : vector<8x128xi1>, vector<8x128xf32>
    %c15_i32 = arith.constant 15 : i32
    %77 = vector.broadcast %c15_i32 : i32 to vector<8x128xi32>
    %78 = arith.cmpi eq, %0, %77 : vector<8x128xi32>
    %c15 = arith.constant 15 : index
    %79 = memref.load %arg1[%c15] : memref<16xf32, #tpu.memory_space<smem>>
    %80 = vector.broadcast %79 : f32 to vector<8x128xf32>
    %81 = arith.select %78, %80, %76 : vector<8x128xi1>, vector<8x128xf32>
    %c0_2 = arith.constant 0 : index
    %c0_3 = arith.constant 0 : index
    %82 = vector.load %arg3[%c0_2, %c0_3] : memref<8x128xf32, #tpu.memory_space<vmem>>, vector<8x128xf32>
    tpu.vector_store %arg3[%c0_2, %c0_3], %81 {strides = array<i32>} : memref<8x128xf32, #tpu.memory_space<vmem>>, vector<8x128xf32>,
    return
  }
  func.func @transform_0(%arg0: i32) -> i32 {
    %c0_i32 = arith.constant 0 : i32
    %c0_i32_0 = arith.constant 0 : i32
    return %c0_i32 : i32
  }
  func.func @transform_1(%arg0: i32) -> (i32, i32) {
    %c0_i32 = arith.constant 0 : i32
    %c0_i32_0 = arith.constant 0 : i32
    return %arg0, %c0_i32 : i32, i32
  }
  func.func @transform_2(%arg0: i32) -> (i32, i32) {
    %c0_i32 = arith.constant 0 : i32
    %c0_i32_0 = arith.constant 0 : i32
    return %arg0, %c0_i32 : i32, i32
  }
}

</mosaic_0001>

<llo_original>
// kernel: position_model_forward.1
$region0: #{position_model_forward.1}
  #allocation0 [shape = 'u32[]', space=smem, size = 0x4, offset = 0x4, fixed_abs, tag = 'smem constant byte address 0x4 - core index']
  #allocation1 [shape = 'u32[144,128]{1,0:T(1,128)}', space=vmem, size = 0x12000, scoped, tag = 'internal scratch']
  %s0 = inlined_call_operand.vmem [shape: f32[16], index: 0, kind: input, shape index: {}]
  %s1 = inlined_call_operand.vmem [shape: s32[8,128], index: 1, kind: input, shape index: {}]
  %s2 = inlined_call_operand.vmem [shape: f32[8,128], index: 2, kind: output, shape index: {}]
  %s3 = sld [smem:[#allocation0]]
  $region22: #{position_model_forward.1} parent=0
    _
  %s5 = ssub.s32 1, %s3
  %s6 = scalar_select 0, %s5, %s3
  $region1: #{position_model_forward.1} parent=0
    #allocation2 [shape = 'u8[512]{0}', space=smem, size = 0x200, scoped, tag = 'input window, operand 0, single buffered']
    #allocation3 [shape = 's32[1]{0}', space=sflag, size = 0x4, scoped, tag = 'scoped memory for position_model_forward.1']
    %7 = vsyncpa [#allocation3], 0
    // Predicated region
    $region2: #{position_model_forward.1} parent=1 // pred_check
      _
    $region3: #{position_model_forward.1} parent=1 // pred_check_branch
      %9 = sbr.rel (0) target = $region5
    $region4: #{position_model_forward.1} parent=1 // pred_region
      %s11 = ssub.s32 16, 16
      %12 = vsyncadd [#allocation3], %s11
      %s14 = sshll.u32 %s0, 4
      %s15 = int_to_ptr.vmem [resolvable:$true] %s14
      %17 = dma.vmem_to_smem %s15, 16, [#allocation2], [#allocation3]
    $region5: #{position_model_forward.1} parent=1 // pred_fallthru
      _
    // Predicated region
    $region6: #{position_model_forward.1} parent=1 // pred_check
      _
    $region7: #{position_model_forward.1} parent=1 // pred_check_branch
      %19 = sbr.rel (0) target = $region9
    $region8: #{position_model_forward.1} parent=1 // pred_region
      _
    $region9: #{position_model_forward.1} parent=1 // pred_fallthru
      _
    // Predicated region
    $region10: #{position_model_forward.1} parent=1 // pred_check
      _
    $region11: #{position_model_forward.1} parent=1 // pred_check_branch
      %21 = sbr.rel (0) target = $region13
    $region12: #{position_model_forward.1} parent=1 // pred_region
      %22 = dma.done [#allocation3], 16
    $region13: #{position_model_forward.1} parent=1 // pred_fallthru
      _
    %23 = sfence
    %v24 = vld [vmem:[%s1] sm:$0xff]
    %vm25 = vcmp.eq.s32.totalorder %v24, 0
    %s26 = sld [smem:[#allocation2]]
    %v27 = vstv %s26
    %v28 = vsel %vm25, %v27, 0.0
    %vm29 = vcmp.eq.s32.totalorder %v24, 1
    %s30 = sld [smem:[#allocation2 + $0x1]]
    %v31 = vstv %s30
    %v32 = vsel %vm29, %v31, %v28
    %vm33 = vcmp.eq.s32.totalorder %v24, 2
    %s34 = sld [smem:[#allocation2 + $0x2]]
    %v35 = vstv %s34
    %v36 = vsel %vm33, %v35, %v32
    %vm37 = vcmp.eq.s32.totalorder %v24, 3
    %s38 = sld [smem:[#allocation2 + $0x3]]
    %v39 = vstv %s38
    %v40 = vsel %vm37, %v39, %v36
    %vm41 = vcmp.eq.s32.totalorder %v24, 4
    %s42 = sld [smem:[#allocation2 + $0x4]]
    %v43 = vstv %s42
    %v44 = vsel %vm41, %v43, %v40
    %vm45 = vcmp.eq.s32.totalorder %v24, 5
    %s46 = sld [smem:[#allocation2 + $0x5]]
    %v47 = vstv %s46
    %v48 = vsel %vm45, %v47, %v44
    %vm49 = vcmp.eq.s32.totalorder %v24, 6
    %s50 = sld [smem:[#allocation2 + $0x6]]
    %v51 = vstv %s50
    %v52 = vsel %vm49, %v51, %v48
    %vm53 = vcmp.eq.s32.totalorder %v24, 7
    %s54 = sld [smem:[#allocation2 + $0x7]]
    %v55 = vstv %s54
    %v56 = vsel %vm53, %v55, %v52
    %vm57 = vcmp.eq.s32.totalorder %v24, 8
    %s58 = sld [smem:[#allocation2 + $0x8]]
    %v59 = vstv %s58
    %v60 = vsel %vm57, %v59, %v56
    %vm61 = vcmp.eq.s32.totalorder %v24, 9
    %s62 = sld [smem:[#allocation2 + $0x9]]
    %v63 = vstv %s62
    %v64 = vsel %vm61, %v63, %v60
    %vm65 = vcmp.eq.s32.totalorder %v24, 10
    %s66 = sld [smem:[#allocation2 + $0xa]]
    %v67 = vstv %s66
    %v68 = vsel %vm65, %v67, %v64
    %vm69 = vcmp.eq.s32.totalorder %v24, 11
    %s70 = sld [smem:[#allocation2 + $0xb]]
    %v71 = vstv %s70
    %v72 = vsel %vm69, %v71, %v68
    %vm73 = vcmp.eq.s32.totalorder %v24, 12
    %s74 = sld [smem:[#allocation2 + $0xc]]
    %v75 = vstv %s74
    %v76 = vsel %vm73, %v75, %v72
    %vm77 = vcmp.eq.s32.totalorder %v24, 13
    %s78 = sld [smem:[#allocation2 + $0xd]]
    %v79 = vstv %s78
    %v80 = vsel %vm77, %v79, %v76
    %vm81 = vcmp.eq.s32.totalorder %v24, 14
    %s82 = sld [smem:[#allocation2 + $0xe]]
    %v83 = vstv %s82
    %v84 = vsel %vm81, %v83, %v80
    %vm85 = vcmp.eq.s32.totalorder %v24, 15
    %s86 = sld [smem:[#allocation2 + $0xf]]
    %v87 = vstv %s86
    %v88 = vsel %vm85, %v87, %v84
    %89 = vst [vmem:[%s2] sm:$0xff] %v88
    // Predicated region
    $region14: #{position_model_forward.1} parent=1 // pred_check
      _
    $region15: #{position_model_forward.1} parent=1 // pred_check_branch
      %91 = sbr.rel (0) target = $region17
    $region16: #{position_model_forward.1} parent=1 // pred_region
      _
    $region17: #{position_model_forward.1} parent=1 // pred_fallthru
      _
    // Predicated region
    $region18: #{position_model_forward.1} parent=1 // pred_check
      _
    $region19: #{position_model_forward.1} parent=1 // pred_check_branch
      %93 = sbr.rel (0) target = $region21
    $region20: #{position_model_forward.1} parent=1 // pred_region
      _
    $region21: #{position_model_forward.1} parent=1 // pred_fallthru
      _
    %94 = vsyncpa [#allocation3], 1

</llo_original>
